<compile_context>
chip_gen: v6e
topology: v6e:2x2x1
jax: 0.10.0
libtpu: 0.0.40
codegen_flags: <defaults>
</compile_context>

<pallas_src>
import math
import functools

import numpy as np
import jax
import jax.numpy as jnp
from jax.experimental import pallas as pl
from jax.experimental.pallas import tpu as pltpu


# --------------------------------------------------------------------------
# Kernels
# --------------------------------------------------------------------------
def _sinus_emb(t_ref, freqs_ref, flip_sin_to_cos):
    """Sinusoidal timestep projection in f32: (N,1)*(1,half) -> (N, 2*half)."""
    arg = t_ref[...] * freqs_ref[...]
    sin_p = jnp.sin(arg)
    cos_p = jnp.cos(arg)
    if flip_sin_to_cos:                        # torch: cat([cos, sin]) if True
        return jnp.concatenate([cos_p, sin_p], axis=-1)
    return jnp.concatenate([sin_p, cos_p], axis=-1)


def _tse_kernel_recompute(t_ref, freqs_ref, w1_ref, b1_ref, w2_ref, b2_ref,
                          o_ref, *, flip_sin_to_cos):
    """Recompute h per column tile (cheap at inference N; keeps 'parallel')."""
    emb = _sinus_emb(t_ref, freqs_ref, flip_sin_to_cos).astype(w1_ref.dtype)
    h = jnp.dot(emb, w1_ref[...], preferred_element_type=jnp.float32) + b1_ref[...]
    h = h * jax.nn.sigmoid(h)                  # SiLU in f32
    h = h.astype(w2_ref.dtype)
    out = jnp.dot(h, w2_ref[...], preferred_element_type=jnp.float32) + b2_ref[...]
    o_ref[...] = out.astype(o_ref.dtype)


def _tse_kernel_hoisted(t_ref, freqs_ref, w1_ref, b1_ref, w2_ref, b2_ref,
                        o_ref, h_ref, *, flip_sin_to_cos):
    """Compute h once (first grid step), stream w2 tiles against the scratch."""
    @pl.when(pl.program_id(0) == 0)
    def _():
        emb = _sinus_emb(t_ref, freqs_ref, flip_sin_to_cos).astype(w1_ref.dtype)
        h = jnp.dot(emb, w1_ref[...], preferred_element_type=jnp.float32) + b1_ref[...]
        h = h * jax.nn.sigmoid(h)
        h_ref[...] = h.astype(h_ref.dtype)

    out = jnp.dot(h_ref[...], w2_ref[...],
                  preferred_element_type=jnp.float32) + b2_ref[...]
    o_ref[...] = out.astype(o_ref.dtype)


# --------------------------------------------------------------------------
# Tiling / VMEM helpers
# --------------------------------------------------------------------------
def _pick_col_tile(hidden_dim, requested=None, max_tile=1536):
    """Largest multiple-of-128 divisor of hidden_dim <= max_tile, preferring an
    even tile count so v7x's two TensorCores get a balanced 'parallel' split."""
    if requested is not None:
        assert hidden_dim % requested == 0
        return requested
    if hidden_dim <= max_tile:
        return hidden_dim
    candidates = [tn for tn in range(max_tile, 127, -128)
                  if tn % 128 == 0 and hidden_dim % tn == 0]
    if not candidates:
        return hidden_dim
    even = [tn for tn in candidates if (hidden_dim // tn) % 2 == 0]
    return even[0] if even else candidates[0]


def _vmem_cap_bytes():
    """~75% of physical per-core VMEM (headroom for compiler scratch)."""
    try:
        return int(0.75 * pltpu.get_tpu_info().vmem_capacity_bytes)
    except Exception:
        return 48 << 20


def prepare_timestep_embedder_params(w1, b1, w2, b2, compute_dtype=jnp.bfloat16):
    """Cast weights to the MXU-native compute dtype ONCE at load time.

    Call this when the parameters are created/loaded and reuse the result for
    every forward call, so no per-call f32->bf16 convert hits HBM."""
    return (w1.astype(compute_dtype), b1.astype(jnp.float32),
            w2.astype(compute_dtype), b2.astype(jnp.float32))


# --------------------------------------------------------------------------
# Wrapper
# --------------------------------------------------------------------------
def timestep_embedder(timesteps, w1, b1, w2, b2, *,
                      embedding_dim, hidden_dim,
                      flip_sin_to_cos=True, downscale_freq_shift=0.0,
                      scale=1.0, max_period=10000,
                      compute_dtype=jnp.bfloat16, out_dtype=jnp.float32,
                      col_tile=None, hoist_h=None):
    assert timesteps.ndim == 1, "Timesteps should be a 1d-array"
    assert embedding_dim % 2 == 0  # TODO(synk): odd embedding_dim pad branch
    half = embedding_dim // 2
    assert abs(half - downscale_freq_shift) > 1e-6, "degenerate freq denominator"
    N = timesteps.shape[0]

    # Frequencies are a pure function of static params -> precompute at trace
    # time with numpy (no iota/div/exp inside the kernel).
    exponent = (-math.log(max_period)) * np.arange(half, dtype=np.float32)
    exponent = exponent / (half - downscale_freq_shift)
    freqs = (np.exp(exponent) * float(scale)).reshape(1, half).astype(np.float32)
    freqs = jnp.asarray(freqs)

    t2d = timesteps.astype(jnp.float32).reshape(N, 1)
    # No-op if the caller already pre-cast with prepare_timestep_embedder_params.
    w1c = w1 if w1.dtype == compute_dtype else w1.astype(compute_dtype)
    w2c = w2 if w2.dtype == compute_dtype else w2.astype(compute_dtype)
    b1_2d = b1.astype(jnp.float32).reshape(1, hidden_dim)
    b2_2d = b2.astype(jnp.float32).reshape(1, hidden_dim)

    tn = _pick_col_tile(hidden_dim, col_tile)
    num_tiles = hidden_dim // tn
    grid = (num_tiles,)
    w_itemsize = jnp.dtype(compute_dtype).itemsize

    # Auto: hoist the first layer only when the redundant recompute could bind
    # (training-scale N) and there is actually more than one tile.  At small N
    # keep the recompute so the axis can stay 'parallel' (v7x megacore split of
    # the dominant w2 stream).
    if hoist_h is None:
        hoist_h = (N >= 128) and (num_tiles > 1)

    if hoist_h:
        kernel = functools.partial(_tse_kernel_hoisted,
                                   flip_sin_to_cos=flip_sin_to_cos)
        scratch_shapes = [pltpu.VMEM((N, hidden_dim), compute_dtype)]
        dim_sem = ("arbitrary",)
        first_layer_repeats = 1
    else:
        kernel = functools.partial(_tse_kernel_recompute,
                                   flip_sin_to_cos=flip_sin_to_cos)
        scratch_shapes = []
        dim_sem = ("parallel",)
        first_layer_repeats = num_tiles

    # VMEM budget: resident blocks (constant block index) + double-buffered
    # tiled blocks (w2/b2/out column tiles) + scratch + margin; capped below
    # physical VMEM to leave compiler headroom (v7x has only 64 MiB).
    resident = (N * 4 + half * 4
                + embedding_dim * hidden_dim * w_itemsize
                + hidden_dim * 4)
    tiled = (hidden_dim * tn * w_itemsize + tn * 4
             + N * tn * jnp.dtype(out_dtype).itemsize)
    scratch_bytes = (N * hidden_dim * w_itemsize) if hoist_h else 0
    vmem_bytes = min(2 * resident + 2 * tiled + scratch_bytes + (4 << 20),
                     _vmem_cap_bytes())

    cost = pl.CostEstimate(
        flops=(2 * N * embedding_dim * hidden_dim + 4 * N * hidden_dim)
              * first_layer_repeats
              + 2 * N * hidden_dim * hidden_dim
              + 2 * N * hidden_dim,
        transcendentals=(2 * N * half + N * hidden_dim) * first_layer_repeats,
        bytes_accessed=(N * 4 + half * 4
                        + embedding_dim * hidden_dim * w_itemsize
                        + hidden_dim * hidden_dim * w_itemsize
                        + 2 * hidden_dim * 4
                        + N * hidden_dim * jnp.dtype(out_dtype).itemsize),
    )

    return pl.pallas_call(
        kernel,
        out_shape=jax.ShapeDtypeStruct((N, hidden_dim), out_dtype),
        grid=grid,
        in_specs=[
            pl.BlockSpec((N, 1), lambda j: (0, 0)),                      # timesteps
            pl.BlockSpec((1, half), lambda j: (0, 0)),                   # freqs
            pl.BlockSpec((embedding_dim, hidden_dim), lambda j: (0, 0)), # w1 (resident)
            pl.BlockSpec((1, hidden_dim), lambda j: (0, 0)),             # b1 (resident)
            pl.BlockSpec((hidden_dim, tn), lambda j: (0, j)),            # w2 column tile
            pl.BlockSpec((1, tn), lambda j: (0, j)),                     # b2 column tile
        ],
        out_specs=pl.BlockSpec((N, tn), lambda j: (0, j)),
        scratch_shapes=scratch_shapes,
        compiler_params=pltpu.CompilerParams(
            dimension_semantics=dim_sem,
            vmem_limit_bytes=int(vmem_bytes),
        ),
        cost_estimate=cost,
    )(t2d, freqs, w1c, b1_2d, w2c, b2_2d)


# --------------------------------------------------------------------------
# Pure-JAX reference (same bf16-matmul / f32-accumulation precision choices)
# --------------------------------------------------------------------------
def _reference(timesteps, w1, b1, w2, b2, *, embedding_dim,
               flip_sin_to_cos=True, downscale_freq_shift=0.0,
               scale=1.0, max_period=10000, compute_dtype=jnp.bfloat16):
    half = embedding_dim // 2
    exponent = -math.log(max_period) * jnp.arange(half, dtype=jnp.float32)
    exponent = exponent / (half - downscale_freq_shift)
    freqs = jnp.exp(exponent)
    emb = timesteps[:, None].astype(jnp.float32) * freqs[None, :]
    emb = scale * emb
    emb = jnp.concatenate([jnp.sin(emb), jnp.cos(emb)], axis=-1)
    if flip_sin_to_cos:
        emb = jnp.concatenate([emb[:, half:], emb[:, :half]], axis=-1)
    emb = emb.astype(compute_dtype)
    h = jnp.dot(emb, w1.astype(compute_dtype),
                preferred_element_type=jnp.float32) + b1.astype(jnp.float32)
    h = h * jax.nn.sigmoid(h)
    h = h.astype(compute_dtype)
    return (jnp.dot(h, w2.astype(compute_dtype),
                    preferred_element_type=jnp.float32)
            + b2.astype(jnp.float32))


if __name__ == "__main__":
    embedding_dim = 256
    hidden_dim = 256
    N = 8

    key = jax.random.PRNGKey(0)
    k_t, k_w1, k_b1, k_w2, k_b2 = jax.random.split(key, 5)

    timesteps = jax.random.uniform(k_t, (N,), jnp.float32, 0.0, 1000.0)
    # nn.Linear default init ~ U(-1/sqrt(in), 1/sqrt(in)); deterministic synthetic init.
    lim1 = 1.0 / math.sqrt(embedding_dim)
    lim2 = 1.0 / math.sqrt(hidden_dim)
    w1 = jax.random.uniform(k_w1, (embedding_dim, hidden_dim), jnp.float32, -lim1, lim1)
    b1 = jax.random.uniform(k_b1, (hidden_dim,), jnp.float32, -lim1, lim1)
    w2 = jax.random.uniform(k_w2, (hidden_dim, hidden_dim), jnp.float32, -lim2, lim2)
    b2 = jax.random.uniform(k_b2, (hidden_dim,), jnp.float32, -lim2, lim2)

    # Pre-cast weights ONCE (parameter-load time), not per call.
    w1c, b1c, w2c, b2c = prepare_timestep_embedder_params(w1, b1, w2, b2)

    ref = _reference(timesteps, w1, b1, w2, b2, embedding_dim=embedding_dim)

    # col_tile=128 -> 2 column tiles: exercises the multi-tile grid at small
    # sizes.  Check both the recompute ('parallel') and hoisted ('arbitrary')
    # paths against the reference.
    for hoist in (False, True):
        out = timestep_embedder(timesteps, w1c, b1c, w2c, b2c,
                                embedding_dim=embedding_dim,
                                hidden_dim=hidden_dim,
                                col_tile=128, hoist_h=hoist)
        out = jax.block_until_ready(out)
        assert out.shape == (N, hidden_dim)
        max_diff = float(jnp.max(jnp.abs(out - ref)))
        assert jnp.allclose(out, ref, atol=1e-2, rtol=1e-2), \
            f"hoist={hoist}: max abs diff {max_diff}"

    # Default (auto) path at the same shapes, single tile.
    out = timestep_embedder(timesteps, w1c, b1c, w2c, b2c,
                            embedding_dim=embedding_dim, hidden_dim=hidden_dim)
    out = jax.block_until_ready(out)
    assert jnp.allclose(out, ref, atol=1e-2, rtol=1e-2)

    print("KERNEL_OK")
</pallas_src>

<mosaic_0001>
module attributes {stable_mosaic.version = 11 : i64} {
  func.func @_tse_kernel_recompute(%arg0: i32, %arg1: memref<8x1xf32, #tpu.memory_space<vmem>>, %arg2: memref<1x128xf32, #tpu.memory_space<vmem>>, %arg3: memref<256x256xbf16, #tpu.memory_space<vmem>>, %arg4: memref<1x256xf32, #tpu.memory_space<vmem>>, %arg5: memref<256x128xbf16, #tpu.memory_space<vmem>>, %arg6: memref<1x128xf32, #tpu.memory_space<vmem>>, %arg7: memref<8x128xf32, #tpu.memory_space<vmem>>) attributes {dimension_semantics = [#tpu.dimension_semantics<parallel>], iteration_bounds = array<i64: 2>, scalar_prefetch = 0 : i64, scratch_operands = 0 : i64, tpu.core_type = #tpu.core_type<tc>, window_params = [{pipeline_mode = #tpu.pipeline_mode<synchronous>, transform_indices = @transform_0, window_bounds = array<i64: 8, 1>}, {pipeline_mode = #tpu.pipeline_mode<synchronous>, transform_indices = @transform_1, window_bounds = array<i64: 1, 128>}, {pipeline_mode = #tpu.pipeline_mode<synchronous>, transform_indices = @transform_2, window_bounds = array<i64: 256, 256>}, {pipeline_mode = #tpu.pipeline_mode<synchronous>, transform_indices = @transform_3, window_bounds = array<i64: 1, 256>}, {transform_indices = @transform_4, window_bounds = array<i64: 256, 128>}, {transform_indices = @transform_5, window_bounds = array<i64: 1, 128>}, {transform_indices = @transform_6, window_bounds = array<i64: 8, 128>}]} {
    %c0 = arith.constant 0 : index
    %c0_0 = arith.constant 0 : index
    %0 = vector.load %arg1[%c0, %c0_0] : memref<8x1xf32, #tpu.memory_space<vmem>>, vector<8x1xf32>
    %c0_1 = arith.constant 0 : index
    %c0_2 = arith.constant 0 : index
    %1 = vector.load %arg2[%c0_1, %c0_2] : memref<1x128xf32, #tpu.memory_space<vmem>>, vector<1x128xf32>
    %2 = vector.broadcast %0 : vector<8x1xf32> to vector<8x128xf32>
    %3 = vector.broadcast %1 : vector<1x128xf32> to vector<8x128xf32>
    %4 = arith.mulf %2, %3 : vector<8x128xf32>
    %5 = math.sin %4 : vector<8x128xf32>
    %6 = math.cos %4 : vector<8x128xf32>
    %7 = tpu.concatenate %6, %5 in 1 : vector<8x128xf32>, vector<8x128xf32> -> vector<8x256xf32>
    %8 = arith.truncf %7 : vector<8x256xf32> to vector<8x256xbf16>
    %c0_3 = arith.constant 0 : index
    %c0_4 = arith.constant 0 : index
    %9 = vector.load %arg3[%c0_3, %c0_4] : memref<256x256xbf16, #tpu.memory_space<vmem>>, vector<256x256xbf16>
    %cst = arith.constant dense<0.000000e+00> : vector<8x256xf32>
    %10 = tpu.matmul %8, %9, %cst {dimension_numbers = #tpu.dot_dimension_numbers<[1], [0], [0], [1], [0, 0, 1, 1], [], []>} : vector<8x256xbf16>, vector<256x256xbf16>, vector<8x256xf32> -> vector<8x256xf32>
    %c0_5 = arith.constant 0 : index
    %c0_6 = arith.constant 0 : index
    %11 = vector.load %arg4[%c0_5, %c0_6] : memref<1x256xf32, #tpu.memory_space<vmem>>, vector<1x256xf32>
    %12 = vector.broadcast %11 : vector<1x256xf32> to vector<8x256xf32>
    %13 = arith.addf %10, %12 : vector<8x256xf32>
    %14 = arith.negf %13 : vector<8x256xf32>
    %15 = math.exp %14 : vector<8x256xf32>
    %cst_7 = arith.constant 1.000000e+00 : f32
    %16 = vector.broadcast %cst_7 : f32 to vector<8x256xf32>
    %17 = arith.addf %16, %15 : vector<8x256xf32>
    %18 = arith.divf %16, %17 : vector<8x256xf32>
    %19 = arith.mulf %13, %18 : vector<8x256xf32>
    %20 = arith.truncf %19 : vector<8x256xf32> to vector<8x256xbf16>
    %c0_8 = arith.constant 0 : index
    %c0_9 = arith.constant 0 : index
    %21 = vector.load %arg5[%c0_8, %c0_9] : memref<256x128xbf16, #tpu.memory_space<vmem>>, vector<256x128xbf16>
    %cst_10 = arith.constant dense<0.000000e+00> : vector<8x128xf32>
    %22 = tpu.matmul %20, %21, %cst_10 {dimension_numbers = #tpu.dot_dimension_numbers<[1], [0], [0], [1], [0, 0, 1, 1], [], []>} : vector<8x256xbf16>, vector<256x128xbf16>, vector<8x128xf32> -> vector<8x128xf32>
    %c0_11 = arith.constant 0 : index
    %c0_12 = arith.constant 0 : index
    %23 = vector.load %arg6[%c0_11, %c0_12] : memref<1x128xf32, #tpu.memory_space<vmem>>, vector<1x128xf32>
    %24 = vector.broadcast %23 : vector<1x128xf32> to vector<8x128xf32>
    %25 = arith.addf %22, %24 : vector<8x128xf32>
    %c0_13 = arith.constant 0 : index
    %c0_14 = arith.constant 0 : index
    %26 = vector.load %arg7[%c0_13, %c0_14] : memref<8x128xf32, #tpu.memory_space<vmem>>, vector<8x128xf32>
    tpu.vector_store %arg7[%c0_13, %c0_14], %25 {strides = array<i32>} : memref<8x128xf32, #tpu.memory_space<vmem>>, vector<8x128xf32>,
    return
  }
  func.func @transform_0(%arg0: i32) -> (i32, i32) {
    %c0_i32 = arith.constant 0 : i32
    %c0_i32_0 = arith.constant 0 : i32
    %c0_i32_1 = arith.constant 0 : i32
    return %c0_i32, %c0_i32_0 : i32, i32
  }
  func.func @transform_1(%arg0: i32) -> (i32, i32) {
    %c0_i32 = arith.constant 0 : i32
    %c0_i32_0 = arith.constant 0 : i32
    %c0_i32_1 = arith.constant 0 : i32
    return %c0_i32, %c0_i32_0 : i32, i32
  }
  func.func @transform_2(%arg0: i32) -> (i32, i32) {
    %c0_i32 = arith.constant 0 : i32
    %c0_i32_0 = arith.constant 0 : i32
    %c0_i32_1 = arith.constant 0 : i32
    return %c0_i32, %c0_i32_0 : i32, i32
  }
  func.func @transform_3(%arg0: i32) -> (i32, i32) {
    %c0_i32 = arith.constant 0 : i32
    %c0_i32_0 = arith.constant 0 : i32
    %c0_i32_1 = arith.constant 0 : i32
    return %c0_i32, %c0_i32_0 : i32, i32
  }
  func.func @transform_4(%arg0: i32) -> (i32, i32) {
    %c0_i32 = arith.constant 0 : i32
    %c0_i32_0 = arith.constant 0 : i32
    return %c0_i32, %arg0 : i32, i32
  }
  func.func @transform_5(%arg0: i32) -> (i32, i32) {
    %c0_i32 = arith.constant 0 : i32
    %c0_i32_0 = arith.constant 0 : i32
    return %c0_i32, %arg0 : i32, i32
  }
  func.func @transform_6(%arg0: i32) -> (i32, i32) {
    %c0_i32 = arith.constant 0 : i32
    %c0_i32_0 = arith.constant 0 : i32
    return %c0_i32, %arg0 : i32, i32
  }
}

</mosaic_0001>

<llo_original>
// kernel: tpu_custom_call.1
$region0: #{tpu_custom_call.1}
  #allocation0 [shape = 'u32[]', space=smem, size = 0x4, offset = 0x4, fixed_abs, tag = 'smem constant byte address 0x4 - core index']
  #allocation1 [shape = 'u32[144,128]{1,0:T(1,128)}', space=vmem, size = 0x12000, scoped, tag = 'internal scratch']
  %s0 = inlined_call_operand.vmem [shape: f32[8,1], index: 0, kind: input, shape index: {}]
  %s1 = inlined_call_operand.vmem [shape: f32[1,128], index: 1, kind: input, shape index: {}]
  %s2 = inlined_call_operand.hbm [shape: bf16[256,256], index: 2, kind: input, shape index: {}]
  %s3 = inlined_call_operand.vmem [shape: f32[1,256], index: 3, kind: input, shape index: {}]
  %s4 = inlined_call_operand.hbm [shape: bf16[256,256], index: 4, kind: input, shape index: {}]
  %s5 = inlined_call_operand.vmem [shape: f32[1,256], index: 5, kind: input, shape index: {}]
  %s6 = inlined_call_operand.hbm [shape: f32[8,256], index: 6, kind: output, shape index: {}]
  %s7 = sld [smem:[#allocation0]]
  $region65: #{tpu_custom_call.1} parent=0
    _
  %s9 = ssub.s32 1, %s7
  %s10 = scalar_select 0, %s9, %s7
  $region1: #{tpu_custom_call.1} parent=0
    #allocation2 [shape = 'u8[131072]{0}', space=vmem, size = 0x20000, scoped, tag = 'input window, operand 2, single buffered']
    #allocation3 [shape = 's32[2]{0}', space=sflag, size = 0x8, scoped, tag = 'scoped memory for tpu_custom_call.1']
    #allocation4 [shape = 's32[2]{0}', space=sflag, size = 0x8, scoped, tag = 'scoped memory for tpu_custom_call.1']
    #allocation5 [shape = 'u8[131072]{0}', space=vmem, size = 0x20000, scoped, tag = 'input window, operand 4']
    #allocation6 [shape = 's32[2]{0}', space=sflag, size = 0x8, scoped, tag = 'scoped memory for tpu_custom_call.1']
    #allocation7 [shape = 'u8[8192]{0}', space=vmem, size = 0x2000, scoped, tag = 'output window, operand 0']
    %11 = vsyncpa [#allocation3], 0
    %12 = vsyncpa [#allocation6], 0
    %s13 = scalar_lea.sflag [#allocation6], 1
    %14 = vsyncpa %s13, 0
    %15 = vsyncpa [#allocation4], 0
    %s16 = scalar_lea.sflag [#allocation4], 1
    %17 = vsyncpa %s16, 0
    loop: start=0, step=1, limit=4
    $region2: #{tpu_custom_call.1} parent=1 // loop_pre_header
      _
    $region3: #{tpu_custom_call.1} parent=1 // loop_header
      %s19 = sphi 0, %s23
      %p20 = scmp.ge.s32.totalorder %s19, 4
      %s27 = sphi 0, %s27
      %s29 = sphi 0, %s27
      %s30 = sphi 0, %s29
      %s44 = sphi 0, %s30
      %s48 = sphi 0, %s48
      %s50 = sphi 0, %s48
      %s51 = sphi 0, %s50
      %s65 = sphi 0, %s51
      %s69 = sphi 0, %s69
      %s71 = sphi 0, %s69
      %s72 = sphi 0, %s71
      %s86 = sphi 0, %s72
      %s90 = sphi 0, %s90
      %s92 = sphi 0, %s90
      %s93 = sphi 0, %s92
      %s107 = sphi 0, %s93
      %s113 = sphi 0, %s115
      %s116 = sphi 0, %s113
      %s117 = sphi 0, %s116
      %s133 = sphi 0, %s117
      %s139 = sphi 0, %s141
      %s142 = sphi 0, %s139
      %s143 = sphi 0, %s142
      %s159 = sphi 0, %s143
      %s165 = sphi 0, %s167
      %s168 = sphi 0, %s165
      %s169 = sphi 0, %s168
      %s185 = sphi 0, %s169
    $region4: #{tpu_custom_call.1} parent=1 // loop_header_branch
      %22 = sbr.rel (%p20) target = $region8
    $region5: #{tpu_custom_call.1} parent=1 // loop_body
      %s24 = ssub.s32 %s19, 1
      %s25 = ssub.s32 %s19, 2
      %s26 = sadd.s32 %s19, 1
      %s28 = sadd.s32 %s27, 1
      %p31 = scmp.eq.s32.totalorder %s19, 1
      %p32 = scmp.ne.s32.totalorder %s27, %s29
      %p33 = scmp.eq.s32.totalorder %s19, 0
      %p34 = por %p32, %p33
      %p35 = scmp.ne.s32.totalorder %s27, %s29
      %p36 = scmp.eq.s32.totalorder %s24, 1
      %p37 = por %p35, %p36
      %p38 = scmp.ne.s32.totalorder %s29, %s30
      %p39 = scmp.eq.s32.totalorder %s24, 0
      %p40 = por %p38, %p39
      %p41 = scmp.ne.s32.totalorder %s29, %s30
      %p42 = scmp.eq.s32.totalorder %s25, 1
      %p43 = por %p41, %p42
      %p45 = scmp.ne.s32.totalorder %s30, %s44
      %p46 = scmp.eq.s32.totalorder %s25, 0
      %p47 = por %p45, %p46
      %s49 = sadd.s32 %s48, 1
      %p52 = scmp.eq.s32.totalorder %s19, 1
      %p53 = scmp.ne.s32.totalorder %s48, %s50
      %p54 = scmp.eq.s32.totalorder %s19, 0
      %p55 = por %p53, %p54
      %p56 = scmp.ne.s32.totalorder %s48, %s50
      %p57 = scmp.eq.s32.totalorder %s24, 1
      %p58 = por %p56, %p57
      %p59 = scmp.ne.s32.totalorder %s50, %s51
      %p60 = scmp.eq.s32.totalorder %s24, 0
      %p61 = por %p59, %p60
      %p62 = scmp.ne.s32.totalorder %s50, %s51
      %p63 = scmp.eq.s32.totalorder %s25, 1
      %p64 = por %p62, %p63
      %p66 = scmp.ne.s32.totalorder %s51, %s65
      %p67 = scmp.eq.s32.totalorder %s25, 0
      %p68 = por %p66, %p67
      %s70 = sadd.s32 %s69, 1
      %p73 = scmp.eq.s32.totalorder %s19, 1
      %p74 = scmp.ne.s32.totalorder %s69, %s71
      %p75 = scmp.eq.s32.totalorder %s19, 0
      %p76 = por %p74, %p75
      %p77 = scmp.ne.s32.totalorder %s69, %s71
      %p78 = scmp.eq.s32.totalorder %s24, 1
      %p79 = por %p77, %p78
      %p80 = scmp.ne.s32.totalorder %s71, %s72
      %p81 = scmp.eq.s32.totalorder %s24, 0
      %p82 = por %p80, %p81
      %p83 = scmp.ne.s32.totalorder %s71, %s72
      %p84 = scmp.eq.s32.totalorder %s25, 1
      %p85 = por %p83, %p84
      %p87 = scmp.ne.s32.totalorder %s72, %s86
      %p88 = scmp.eq.s32.totalorder %s25, 0
      %p89 = por %p87, %p88
      %s91 = sadd.s32 %s90, 1
      %p94 = scmp.eq.s32.totalorder %s19, 1
      %p95 = scmp.ne.s32.totalorder %s90, %s92
      %p96 = scmp.eq.s32.totalorder %s19, 0
      %p97 = por %p95, %p96
      %p98 = scmp.ne.s32.totalorder %s90, %s92
      %p99 = scmp.eq.s32.totalorder %s24, 1
      %p100 = por %p98, %p99
      %p101 = scmp.ne.s32.totalorder %s92, %s93
      %p102 = scmp.eq.s32.totalorder %s24, 0
      %p103 = por %p101, %p102
      %p104 = scmp.ne.s32.totalorder %s92, %s93
      %p105 = scmp.eq.s32.totalorder %s25, 1
      %p106 = por %p104, %p105
      %p108 = scmp.ne.s32.totalorder %s93, %s107
      %p109 = scmp.eq.s32.totalorder %s25, 0
      %p110 = por %p108, %p109
      %s111 = ssub.s32 %s19, %s26
      %p112 = scmp.eq.s32.totalorder %s111, 0
      %s114 = sadd.s32 %s113, 1
      %s115 = scalar_select %p112, %s113, %s114
      %p118 = pneg %p112
      %p119 = scmp.eq.s32.totalorder %s19, 1
      %p120 = por %p118, %p119
      %p121 = scmp.ne.s32.totalorder %s113, %s116
      %p122 = scmp.eq.s32.totalorder %s19, 0
      %p123 = por %p121, %p122
      %p124 = scmp.ne.s32.totalorder %s113, %s116
      %p125 = scmp.eq.s32.totalorder %s24, 1
      %p126 = por %p124, %p125
      %p127 = scmp.ne.s32.totalorder %s116, %s117
      %p128 = scmp.eq.s32.totalorder %s24, 0
      %p129 = por %p127, %p128
      %p130 = scmp.ne.s32.totalorder %s116, %s117
      %p131 = scmp.eq.s32.totalorder %s25, 1
      %p132 = por %p130, %p131
      %p134 = scmp.ne.s32.totalorder %s117, %s133
      %p135 = scmp.eq.s32.totalorder %s25, 0
      %p136 = por %p134, %p135
      %s137 = ssub.s32 %s19, %s26
      %p138 = scmp.eq.s32.totalorder %s137, 0
      %s140 = sadd.s32 %s139, 1
      %s141 = scalar_select %p138, %s139, %s140
      %p144 = pneg %p138
      %p145 = scmp.eq.s32.totalorder %s19, 1
      %p146 = por %p144, %p145
      %p147 = scmp.ne.s32.totalorder %s139, %s142
      %p148 = scmp.eq.s32.totalorder %s19, 0
      %p149 = por %p147, %p148
      %p150 = scmp.ne.s32.totalorder %s139, %s142
      %p151 = scmp.eq.s32.totalorder %s24, 1
      %p152 = por %p150, %p151
      %p153 = scmp.ne.s32.totalorder %s142, %s143
      %p154 = scmp.eq.s32.totalorder %s24, 0
      %p155 = por %p153, %p154
      %p156 = scmp.ne.s32.totalorder %s142, %s143
      %p157 = scmp.eq.s32.totalorder %s25, 1
      %p158 = por %p156, %p157
      %p160 = scmp.ne.s32.totalorder %s143, %s159
      %p161 = scmp.eq.s32.totalorder %s25, 0
      %p162 = por %p160, %p161
      %s163 = ssub.s32 %s19, %s26
      %p164 = scmp.eq.s32.totalorder %s163, 0
      %s166 = sadd.s32 %s165, 1
      %s167 = scalar_select %p164, %s165, %s166
      %p170 = pneg %p164
      %p171 = scmp.eq.s32.totalorder %s19, 1
      %p172 = por %p170, %p171
      %p173 = scmp.ne.s32.totalorder %s165, %s168
      %p174 = scmp.eq.s32.totalorder %s19, 0
      %p175 = por %p173, %p174
      %p176 = scmp.ne.s32.totalorder %s165, %s168
      %p177 = scmp.eq.s32.totalorder %s24, 1
      %p178 = por %p176, %p177
      %p179 = scmp.ne.s32.totalorder %s168, %s169
      %p180 = scmp.eq.s32.totalorder %s24, 0
      %p181 = por %p179, %p180
      %p182 = scmp.ne.s32.totalorder %s168, %s169
      %p183 = scmp.eq.s32.totalorder %s25, 1
      %p184 = por %p182, %p183
      %p186 = scmp.ne.s32.totalorder %s169, %s185
      %p187 = scmp.eq.s32.totalorder %s25, 0
      %p188 = por %p186, %p187
      %p189 = scmp.le.s32.totalorder 1, %s19
      %p190 = scmp.lt.s32.totalorder %s19, 3
      %p191 = pnand %p189, %p190
      %p192 = pneg %p191
      // Predicated region
      $region9: #{tpu_custom_call.1} parent=5 // pred_check
        _
      $region10: #{tpu_custom_call.1} parent=5 // pred_check_branch
        %194 = sbr.rel (%p191) target = $region12
      $region11: #{tpu_custom_call.1} parent=5 // pred_region
        %s195 = ssub.s32 %s19, 1
        // Predicated region
        $region13: #{tpu_custom_call.1} parent=11 // pred_check
          %p196 = pneg %p40
        $region14: #{tpu_custom_call.1} parent=11 // pred_check_branch
          %198 = sbr.rel (%p196) target = $region16
        $region15: #{tpu_custom_call.1} parent=11 // pred_region
          _
        $region16: #{tpu_custom_call.1} parent=11 // pred_fallthru
          _
        // Predicated region
        $region17: #{tpu_custom_call.1} parent=11 // pred_check
          %p199 = pneg %p61
        $region18: #{tpu_custom_call.1} parent=11 // pred_check_branch
          %201 = sbr.rel (%p199) target = $region20
        $region19: #{tpu_custom_call.1} parent=11 // pred_region
          _
        $region20: #{tpu_custom_call.1} parent=11 // pred_fallthru
          _
        // Predicated region
        $region21: #{tpu_custom_call.1} parent=11 // pred_check
          %p202 = pneg %p82
        $region22: #{tpu_custom_call.1} parent=11 // pred_check_branch
          %204 = sbr.rel (%p202) target = $region24
        $region23: #{tpu_custom_call.1} parent=11 // pred_region
          %s206 = ssub.s32 4096, 4096
          %207 = vsyncadd [#allocation3], %s206
          %s208 = sshll.u32 [#allocation2], 4
          %s209 = int_to_ptr.vmem [resolvable:$true] %s208
          %214 = dma.hbm_to_vmem [thread:$0]  %s2, 4096, %s209, [#allocation3], 128, 128, 8
        $region24: #{tpu_custom_call.1} parent=11 // pred_fallthru
          _
        // Predicated region
        $region25: #{tpu_custom_call.1} parent=11 // pred_check
          %p215 = pneg %p103
        $region26: #{tpu_custom_call.1} parent=11 // pred_check_branch
          %217 = sbr.rel (%p215) target = $region28
        $region27: #{tpu_custom_call.1} parent=11 // pred_region
          _
        $region28: #{tpu_custom_call.1} parent=11 // pred_fallthru
          _
      $region12: #{tpu_custom_call.1} parent=5 // pred_fallthru
        _
      %p218 = scmp.lt.s32.totalorder %s19, 2
      // Predicated region
      $region29: #{tpu_custom_call.1} parent=5 // pred_check
        %p219 = pneg %p218
      $region30: #{tpu_custom_call.1} parent=5 // pred_check_branch
        %221 = sbr.rel (%p219) target = $region32
      $region31: #{tpu_custom_call.1} parent=5 // pred_region
        // Predicated region
        $region33: #{tpu_custom_call.1} parent=31 // pred_check
          %p222 = pneg %p123
        $region34: #{tpu_custom_call.1} parent=31 // pred_check_branch
          %224 = sbr.rel (%p222) target = $region36
        $region35: #{tpu_custom_call.1} parent=31 // pred_region
          %s225 = sand.u32 %s113, 1
          %s226 = scalar_lea.sflag [#allocation6], %s225
          %s227 = sand.u32 %s113, 1
          %s228 = smul.addr %s227, 128
          %s229 = scalar_lea.vmem [#allocation5], %s228
          %s231 = ssub.s32 2048, 2048
          %232 = vsyncadd %s226, %s231
          %s233 = smul.addr %s19, 64
          %s234 = scalar_lea.hbm %s4, %s233
          %s235 = sshll.u32 %s229, 4
          %s236 = int_to_ptr.vmem [resolvable:$true] %s235
          %241 = dma.hbm_to_vmem [thread:$0]  %s234, 2048, %s236, %s226, 128, 64, 4
        $region36: #{tpu_custom_call.1} parent=31 // pred_fallthru
          _
        // Predicated region
        $region37: #{tpu_custom_call.1} parent=31 // pred_check
          %p242 = pneg %p149
        $region38: #{tpu_custom_call.1} parent=31 // pred_check_branch
          %244 = sbr.rel (%p242) target = $region40
        $region39: #{tpu_custom_call.1} parent=31 // pred_region
          %p245 = scmp.lt.s32.totalorder %s19, 1
          %s246 = scalar_select %p245, %s19, 1
          %s247 = scalar_lea.vmem %s5, %s246
        $region40: #{tpu_custom_call.1} parent=31 // pred_fallthru
          _
      $region32: #{tpu_custom_call.1} parent=5 // pred_fallthru
        _
      %p248 = scmp.le.s32.totalorder 1, %s19
      %p249 = scmp.lt.s32.totalorder %s19, 3
      %p250 = pnand %p248, %p249
      %p251 = pneg %p250
      // Predicated region
      $region41: #{tpu_custom_call.1} parent=5 // pred_check
        _
      $region42: #{tpu_custom_call.1} parent=5 // pred_check_branch
        %253 = sbr.rel (%p250) target = $region44
      $region43: #{tpu_custom_call.1} parent=5 // pred_region
        %s254 = ssub.s32 %s19, 1
        // Predicated region
        $region45: #{tpu_custom_call.1} parent=43 // pred_check
          %p255 = pneg %p82
        $region46: #{tpu_custom_call.1} parent=43 // pred_check_branch
          %257 = sbr.rel (%p255) target = $region48
        $region47: #{tpu_custom_call.1} parent=43 // pred_region
          %258 = dma.done [#allocation3], 4096
        $region48: #{tpu_custom_call.1} parent=43 // pred_fallthru
          _
        %s259 = sand.u32 %s116, 1
        %s260 = scalar_lea.sflag [#allocation6], %s259
        %s261 = sand.u32 %s116, 1
        %s262 = smul.addr %s261, 128
        %s263 = scalar_lea.vmem [#allocation5], %s262
        // Predicated region
        $region49: #{tpu_custom_call.1} parent=43 // pred_check
          %p264 = pneg %p129
        $region50: #{tpu_custom_call.1} parent=43 // pred_check_branch
          %266 = sbr.rel (%p264) target = $region52
        $region51: #{tpu_custom_call.1} parent=43 // pred_region
          %267 = dma.done %s260, 2048
        $region52: #{tpu_custom_call.1} parent=43 // pred_fallthru
          _
        %p268 = pneg %p40
        %p269 = pneg %p37
        %p270 = pneg %p61
        %p271 = pneg %p58
        %p272 = pneg %p82
        %p273 = pneg %p79
        %p274 = pneg %p103
        %p275 = pneg %p100
        %s276 = sand.u32 %s116, 1
        %s277 = scalar_lea.sflag [#allocation6], %s276
        %s278 = sand.u32 %s116, 1
        %s279 = smul.addr %s278, 128
        %s280 = scalar_lea.vmem [#allocation5], %s279
        %p281 = pneg %p129
        %p282 = pneg %p126
        %p283 = scmp.lt.s32.totalorder %s24, 1
        %s284 = scalar_select %p283, %s24, 1
        %s285 = scalar_lea.vmem %s5, %s284
        %p286 = pneg %p155
        %p287 = pneg %p152
        %p288 = pneg %p181
        %p289 = pneg %p178
        %s290 = sand.u32 %s168, 1
        %s291 = scalar_lea.sflag [#allocation4], %s290
        %s292 = sand.u32 %s168, 1
        %s293 = smul.addr %s292, 8
        %s294 = scalar_lea.vmem [#allocation7], %s293
        %p295 = scmp.lt.s32.totalorder %s24, 1
        %s296 = scalar_select %p295, %s24, 1
        %s297 = scalar_lea.vmem %s5, %s296
        %v299 = vld [vmem:[%s0] sm:$0xff]
        %v300 = vld [vmem:[%s1] sm:$0x1]
        %302 = vset.pattern.permute.xlu0 0
        %303 = vperm.xlu0 %302, %v299
        %v304 = vpop.permute.xlu0 %303
        %v307 = vlaneseq
        %v308 = vshrl.u32 %v307, 7
        %v309 = vsub.s32 0, %v308
        %v310 = vrot.slane %v300, %v309
        %v312 = vmul.f32 %v304, %v310
        %v313 = vand.u32 2147483647, %v312
        %vm314 = vcmp.le.f32.partialorder %v313, 0.7853982
        %vm315 = vcmp.lt.s32.totalorder %v312, 0
        %v316 = vand.u32 %v312, 2139095040
        %v317 = vshrl.u32 %v316, 23
        %v318 = vsub.s32 %v317, 127
        %v319 = vand.u32 2147483647, %v312
        %v320 = vand.u32 %v319, 8388607
        %v321 = vor.u32 %v320, 8388608
        %v322 = vsub.s32 0, %v321
        %v323 = vadd.s32 %v318, 1
        %vm324 = vcmp.gt.s32.totalorder %v323, 0
        %v325 = vsel %vm324, %v323, 0
        %v326 = vshrl.u32 %v325, 5
        %v327 = vand.u32 %v325, 31
        %v328 = vsub.s32 32, %v327
        %v329 = vshrl.u32 683565275, %v328
        %v330 = vshll.u32 683565275, %v327
        %v331 = vshrl.u32 2475754826, %v328
        %v332 = vor.u32 %v330, %v331
        %v333 = vshll.u32 2475754826, %v327
        %v334 = vshrl.u32 2131351028, %v328
        %v335 = vor.u32 %v333, %v334
        %v336 = vshll.u32 2131351028, %v327
        %v337 = vshrl.u32 2102212464, %v328
        %v338 = vor.u32 %v336, %v337
        %v339 = vshll.u32 2102212464, %v327
        %v340 = vshrl.u32 920167782, %v328
        %v341 = vor.u32 %v339, %v340
        %v342 = vshll.u32 920167782, %v327
        %v343 = vshrl.u32 1326507024, %v328
        %v344 = vor.u32 %v342, %v343
        %vm345 = vcmp.lt.s32.totalorder %v326, 1
        %vm346 = vcmp.lt.s32.totalorder %v326, 2
        %vm347 = vcmp.lt.s32.totalorder %v326, 3
        %vm348 = vcmp.lt.s32.totalorder %v326, 4
        %v349 = vsel %vm345, %v329, %v332
        %v350 = vsel %vm348, %v338, 2102212464
        %v351 = vsel %vm347, %v335, %v350
        %v352 = vsel %vm346, %v349, %v351
        %v353 = vsel %vm345, %v332, %v335
        %v354 = vsel %vm348, %v341, 920167782
        %v355 = vsel %vm347, %v338, %v354
        %v356 = vsel %vm346, %v353, %v355
        %v357 = vsel %vm345, %v335, %v338
        %v358 = vsel %vm348, %v344, 1326507024
        %v359 = vsel %vm347, %v341, %v358
        %v360 = vsel %vm346, %v357, %v359
        %v361 = vshll.u32 %v321, 8
        %v362 = vmul.u32.u64.compose %v361, %v360
        %v363 = vextract.low.u32 %v362
        %v364 = vextract.high.u32 %v362
        %v365 = vmul.u32.u64.compose %v361, %v356
        %v366 = vextract.low.u32 %v365
        %v367 = vextract.high.u32 %v365
        %v368 = vmul.u32 %v361, %v352
        %v369 = vadd.s32 %v364, %v366
        %vm370 = vc.u32 %v364, %v366
        %v371 = vadd.s32 %v367, 1
        %v372 = vsel %vm370, %v371, %v367
        %v373 = vadd.s32 %v368, %v372
        %v374 = vadd.s32 %v373, 536870912
        %v375 = vshrl.u32 %v374, 30
        %v376 = vshll.u32 %v375, 30
        %v377 = vsub.s32 %v373, %v376
        %vm378 = vcmp.lt.s32.totalorder %v377, 0
        %v379 = vsub.s32 0, %v377
        %v380 = vsel %vm378, %v379, %v377
        %v381 = vclz %v380
        %v382 = vsub.s32 %v381, 2
        %vm383 = vcmp.gt.s32.totalorder 0, %v382
        %v384 = vsel %vm383, 0, %v382
        %v385 = vsub.s32 32, %v384
        %v386 = vshll.u32 %v377, %v384
        %v387 = vshrl.u32 %v369, %v385
        %v388 = vor.u32 %v386, %v387
        %v389 = vsub.s32 4294967266, %v384
        %v390 = vadd.s32 %v389, 127
        %v391 = vshll.u32 %v390, 23
        %v392 = vor.u32 4788187, %v391
        %v393 = vand.u32 2147483647, %v392
        %v395 = vcvt.s32.f32 %v388
        %v396 = vmul.f32 %v395, %v393
        %v397 = vxor.u32 %v396, 2147483648
        %v398 = vsel %vm315, %v397, %v396
        %v399 = vsub.s32 4, %v375
        %v400 = vsel %vm315, %v399, %v375
        %v401 = vsel %vm314, %v312, %v398
        %v402 = vsel %vm314, 0, %v400
        %v403 = vcosq.f32.pop %v401
        %v404 = vsinq.f32.pop %v401
        %vm405 = vweird.f32 %v312
        %v406 = vadd.s32 %v402, 3
        %v407 = vand.u32 %v406, 3
        %vm408 = vcmp.lt.s32.totalorder %v407, 2
        %vm409 = vcmp.eq.s32.totalorder %v407, 0
        %v410 = vxor.u32 %v404, 2147483648
        %v411 = vsel %vm409, %v403, %v410
        %vm412 = vcmp.eq.s32.totalorder %v407, 2
        %v413 = vxor.u32 %v403, 2147483648
        %v414 = vsel %vm412, %v413, %v404
        %v415 = vsel %vm408, %v411, %v414
        %v416 = vsel %vm405, nan, %v415
        %v417 = vand.u32 2147483647, %v312
        %vm418 = vcmp.le.f32.partialorder %v417, 0.7853982
        %vm419 = vcmp.lt.s32.totalorder %v312, 0
        %v420 = vand.u32 %v312, 2139095040
        %v421 = vshrl.u32 %v420, 23
        %v422 = vsub.s32 %v421, 127
        %v423 = vand.u32 2147483647, %v312
        %v424 = vand.u32 %v423, 8388607
        %v425 = vor.u32 %v424, 8388608
        %v426 = vsub.s32 0, %v425
        %v427 = vadd.s32 %v422, 1
        %vm428 = vcmp.gt.s32.totalorder %v427, 0
        %v429 = vsel %vm428, %v427, 0
        %v430 = vshrl.u32 %v429, 5
        %v431 = vand.u32 %v429, 31
        %v432 = vsub.s32 32, %v431
        %v433 = vshrl.u32 683565275, %v432
        %v434 = vshll.u32 683565275, %v431
        %v435 = vshrl.u32 2475754826, %v432
        %v436 = vor.u32 %v434, %v435
        %v437 = vshll.u32 2475754826, %v431
        %v438 = vshrl.u32 2131351028, %v432
        %v439 = vor.u32 %v437, %v438
        %v440 = vshll.u32 2131351028, %v431
        %v441 = vshrl.u32 2102212464, %v432
        %v442 = vor.u32 %v440, %v441
        %v443 = vshll.u32 2102212464, %v431
        %v444 = vshrl.u32 920167782, %v432
        %v445 = vor.u32 %v443, %v444
        %v446 = vshll.u32 920167782, %v431
        %v447 = vshrl.u32 1326507024, %v432
        %v448 = vor.u32 %v446, %v447
        %vm449 = vcmp.lt.s32.totalorder %v430, 1
        %vm450 = vcmp.lt.s32.totalorder %v430, 2
        %vm451 = vcmp.lt.s32.totalorder %v430, 3
        %vm452 = vcmp.lt.s32.totalorder %v430, 4
        %v453 = vsel %vm449, %v433, %v436
        %v454 = vsel %vm452, %v442, 2102212464
        %v455 = vsel %vm451, %v439, %v454
        %v456 = vsel %vm450, %v453, %v455
        %v457 = vsel %vm449, %v436, %v439
        %v458 = vsel %vm452, %v445, 920167782
        %v459 = vsel %vm451, %v442, %v458
        %v460 = vsel %vm450, %v457, %v459
        %v461 = vsel %vm449, %v439, %v442
        %v462 = vsel %vm452, %v448, 1326507024
        %v463 = vsel %vm451, %v445, %v462
        %v464 = vsel %vm450, %v461, %v463
        %v465 = vshll.u32 %v425, 8
        %v466 = vmul.u32.u64.compose %v465, %v464
        %v467 = vextract.low.u32 %v466
        %v468 = vextract.high.u32 %v466
        %v469 = vmul.u32.u64.compose %v465, %v460
        %v470 = vextract.low.u32 %v469
        %v471 = vextract.high.u32 %v469
        %v472 = vmul.u32 %v465, %v456
        %v473 = vadd.s32 %v468, %v470
        %vm474 = vc.u32 %v468, %v470
        %v475 = vadd.s32 %v471, 1
        %v476 = vsel %vm474, %v475, %v471
        %v477 = vadd.s32 %v472, %v476
        %v478 = vadd.s32 %v477, 536870912
        %v479 = vshrl.u32 %v478, 30
        %v480 = vshll.u32 %v479, 30
        %v481 = vsub.s32 %v477, %v480
        %vm482 = vcmp.lt.s32.totalorder %v481, 0
        %v483 = vsub.s32 0, %v481
        %v484 = vsel %vm482, %v483, %v481
        %v485 = vclz %v484
        %v486 = vsub.s32 %v485, 2
        %vm487 = vcmp.gt.s32.totalorder 0, %v486
        %v488 = vsel %vm487, 0, %v486
        %v489 = vsub.s32 32, %v488
        %v490 = vshll.u32 %v481, %v488
        %v491 = vshrl.u32 %v473, %v489
        %v492 = vor.u32 %v490, %v491
        %v493 = vsub.s32 4294967266, %v488
        %v494 = vadd.s32 %v493, 127
        %v495 = vshll.u32 %v494, 23
        %v496 = vor.u32 4788187, %v495
        %v497 = vand.u32 2147483647, %v496
        %v499 = vcvt.s32.f32 %v492
        %v500 = vmul.f32 %v499, %v497
        %v501 = vxor.u32 %v500, 2147483648
        %v502 = vsel %vm419, %v501, %v500
        %v503 = vsub.s32 4, %v479
        %v504 = vsel %vm419, %v503, %v479
        %v505 = vsel %vm418, %v312, %v502
        %v506 = vsel %vm418, 0, %v504
        %v507 = vcosq.f32.pop %v505
        %v508 = vsinq.f32.pop %v505
        %vm509 = vweird.f32 %v312
        %v510 = vand.u32 %v506, 3
        %vm511 = vcmp.lt.s32.totalorder %v510, 2
        %vm512 = vcmp.eq.s32.totalorder %v510, 0
        %v513 = vxor.u32 %v508, 2147483648
        %v514 = vsel %vm512, %v507, %v513
        %vm515 = vcmp.eq.s32.totalorder %v510, 2
        %v516 = vxor.u32 %v507, 2147483648
        %v517 = vsel %vm515, %v516, %v508
        %v518 = vsel %vm511, %v514, %v517
        %v519 = vsel %vm509, nan, %v518
        %v520 = vpack.c.bf16 %v519, %v519
        %v521 = vpack.c.bf16 %v416, %v416
        %v522 = vld [vmem:[#allocation2] sm:$0xff]
        %v523 = vld [vmem:[#allocation2 + $0x8] sm:$0xff]
        %v524 = vld [vmem:[#allocation2 + $0x10] sm:$0xff]
        %v525 = vld [vmem:[#allocation2 + $0x18] sm:$0xff]
        %v526 = vld [vmem:[#allocation2 + $0x20] sm:$0xff]
        %v527 = vld [vmem:[#allocation2 + $0x28] sm:$0xff]
        %v528 = vld [vmem:[#allocation2 + $0x30] sm:$0xff]
        %v529 = vld [vmem:[#allocation2 + $0x38] sm:$0xff]
        %v530 = vld [vmem:[#allocation2 + $0x40] sm:$0xff]
        %v531 = vld [vmem:[#allocation2 + $0x48] sm:$0xff]
        %v532 = vld [vmem:[#allocation2 + $0x50] sm:$0xff]
        %v533 = vld [vmem:[#allocation2 + $0x58] sm:$0xff]
        %v534 = vld [vmem:[#allocation2 + $0x60] sm:$0xff]
        %v535 = vld [vmem:[#allocation2 + $0x68] sm:$0xff]
        %v536 = vld [vmem:[#allocation2 + $0x70] sm:$0xff]
        %v537 = vld [vmem:[#allocation2 + $0x78] sm:$0xff]
        %v538 = vld [vmem:[#allocation2 + $0x80] sm:$0xff]
        %v539 = vld [vmem:[#allocation2 + $0x88] sm:$0xff]
        %v540 = vld [vmem:[#allocation2 + $0x90] sm:$0xff]
        %v541 = vld [vmem:[#allocation2 + $0x98] sm:$0xff]
        %v542 = vld [vmem:[#allocation2 + $0xa0] sm:$0xff]
        %v543 = vld [vmem:[#allocation2 + $0xa8] sm:$0xff]
        %v544 = vld [vmem:[#allocation2 + $0xb0] sm:$0xff]
        %v545 = vld [vmem:[#allocation2 + $0xb8] sm:$0xff]
        %v546 = vld [vmem:[#allocation2 + $0xc0] sm:$0xff]
        %v547 = vld [vmem:[#allocation2 + $0xc8] sm:$0xff]
        %v548 = vld [vmem:[#allocation2 + $0xd0] sm:$0xff]
        %v549 = vld [vmem:[#allocation2 + $0xd8] sm:$0xff]
        %v550 = vld [vmem:[#allocation2 + $0xe0] sm:$0xff]
        %v551 = vld [vmem:[#allocation2 + $0xe8] sm:$0xff]
        %v552 = vld [vmem:[#allocation2 + $0xf0] sm:$0xff]
        %v553 = vld [vmem:[#allocation2 + $0xf8] sm:$0xff]
        %v554 = vld [vmem:[%s3] sm:$0x3]
        %v556 = vlaneseq
        %v557 = vshrl.u32 %v556, 7
        %v558 = vsub.s32 0, %v557
        %v559 = vrot.slane %v554, %v558
        %v560 = vlaneseq
        %v561 = vshrl.u32 %v560, 7
        %v562 = vsub.s32 1, %v561
        %v563 = vrot.slane %v554, %v562
        %v598 = vunpack.c.l.b16 %v522
        %v599 = vunpack.c.h.b16 %v522
        %v600 = vunpack.c.l.b16 %v523
        %v601 = vunpack.c.h.b16 %v523
        %v602 = vunpack.c.l.b16 %v524
        %v603 = vunpack.c.h.b16 %v524
        %v604 = vunpack.c.l.b16 %v525
        %v605 = vunpack.c.h.b16 %v525
        %v606 = vunpack.c.l.b16 %v526
        %v607 = vunpack.c.h.b16 %v526
        %v608 = vunpack.c.l.b16 %v527
        %v609 = vunpack.c.h.b16 %v527
        %v610 = vunpack.c.l.b16 %v528
        %v611 = vunpack.c.h.b16 %v528
        %v612 = vunpack.c.l.b16 %v529
        %v613 = vunpack.c.h.b16 %v529
        %v614 = vunpack.c.l.b16 %v530
        %v615 = vunpack.c.h.b16 %v530
        %v616 = vunpack.c.l.b16 %v531
        %v617 = vunpack.c.h.b16 %v531
        %v618 = vunpack.c.l.b16 %v532
        %v619 = vunpack.c.h.b16 %v532
        %v620 = vunpack.c.l.b16 %v533
        %v621 = vunpack.c.h.b16 %v533
        %v622 = vunpack.c.l.b16 %v534
        %v623 = vunpack.c.h.b16 %v534
        %v624 = vunpack.c.l.b16 %v535
        %v625 = vunpack.c.h.b16 %v535
        %v626 = vunpack.c.l.b16 %v536
        %v627 = vunpack.c.h.b16 %v536
        %v628 = vunpack.c.l.b16 %v537
        %v629 = vunpack.c.h.b16 %v537
        %v630 = vunpack.c.l.b16 %v538
        %v631 = vunpack.c.h.b16 %v538
        %v632 = vunpack.c.l.b16 %v539
        %v633 = vunpack.c.h.b16 %v539
        %v634 = vunpack.c.l.b16 %v540
        %v635 = vunpack.c.h.b16 %v540
        %v636 = vunpack.c.l.b16 %v541
        %v637 = vunpack.c.h.b16 %v541
        %v638 = vunpack.c.l.b16 %v542
        %v639 = vunpack.c.h.b16 %v542
        %v640 = vunpack.c.l.b16 %v543
        %v641 = vunpack.c.h.b16 %v543
        %v642 = vunpack.c.l.b16 %v544
        %v643 = vunpack.c.h.b16 %v544
        %v644 = vunpack.c.l.b16 %v545
        %v645 = vunpack.c.h.b16 %v545
        %v646 = vunpack.c.l.b16 %v546
        %v647 = vunpack.c.h.b16 %v546
        %v648 = vunpack.c.l.b16 %v547
        %v649 = vunpack.c.h.b16 %v547
        %v650 = vunpack.c.l.b16 %v548
        %v651 = vunpack.c.h.b16 %v548
        %v652 = vunpack.c.l.b16 %v549
        %v653 = vunpack.c.h.b16 %v549
        %v654 = vunpack.c.l.b16 %v550
        %v655 = vunpack.c.h.b16 %v550
        %v656 = vunpack.c.l.b16 %v551
        %v657 = vunpack.c.h.b16 %v551
        %v658 = vunpack.c.l.b16 %v552
        %v659 = vunpack.c.h.b16 %v552
        %v660 = vunpack.c.l.b16 %v553
        %v661 = vunpack.c.h.b16 %v553
        %v662 = vpack.c.b16 %v600, %v598
        %v663 = vpack.c.b16 %v601, %v599
        %v664 = vpack.c.b16 %v604, %v602
        %v665 = vpack.c.b16 %v605, %v603
        %v666 = vpack.c.b16 %v608, %v606
        %v667 = vpack.c.b16 %v609, %v607
        %v668 = vpack.c.b16 %v612, %v610
        %v669 = vpack.c.b16 %v613, %v611
        %v670 = vpack.c.b16 %v616, %v614
        %v671 = vpack.c.b16 %v617, %v615
        %v672 = vpack.c.b16 %v620, %v618
        %v673 = vpack.c.b16 %v621, %v619
        %v674 = vpack.c.b16 %v624, %v622
        %v675 = vpack.c.b16 %v625, %v623
        %v676 = vpack.c.b16 %v628, %v626
        %v677 = vpack.c.b16 %v629, %v627
        %v678 = vpack.c.b16 %v632, %v630
        %v679 = vpack.c.b16 %v633, %v631
        %v680 = vpack.c.b16 %v636, %v634
        %v681 = vpack.c.b16 %v637, %v635
        %v682 = vpack.c.b16 %v640, %v638
        %v683 = vpack.c.b16 %v641, %v639
        %v684 = vpack.c.b16 %v644, %v642
        %v685 = vpack.c.b16 %v645, %v643
        %v686 = vpack.c.b16 %v648, %v646
        %v687 = vpack.c.b16 %v649, %v647
        %v688 = vpack.c.b16 %v652, %v650
        %v689 = vpack.c.b16 %v653, %v651
        %v690 = vpack.c.b16 %v656, %v654
        %v691 = vpack.c.b16 %v657, %v655
        %v692 = vpack.c.b16 %v660, %v658
        %v693 = vpack.c.b16 %v661, %v659
        %726 = vmatprep.subr.bf16.mxu0 %v677
        %727 = vmatpush1.bf16.msra.mxu0 %v676
        %728 = vmatprep.subr.bf16.mxu0 %v675
        %729 = vmatpush1.bf16.msra.mxu0 %v674
        %730 = vmatprep.subr.bf16.mxu0 %v673
        %731 = vmatpush1.bf16.msra.mxu0 %v672
        %732 = vmatprep.subr.bf16.mxu0 %v671
        %733 = vmatpush1.bf16.msra.mxu0 %v670
        %734 = vmatprep.subr.bf16.mxu0 %v669
        %735 = vmatpush1.bf16.msra.mxu0 %v668
        %736 = vmatprep.subr.bf16.mxu0 %v667
        %737 = vmatpush1.bf16.msra.mxu0 %v666
        %738 = vmatprep.subr.bf16.mxu0 %v665
        %739 = vmatpush1.bf16.msra.mxu0 %v664
        %740 = vmatprep.subr.bf16.mxu0 %v663
        %741 = vmatpush1.bf16.msra.mxu0 %v662
        %742 = vmatprep.subr.bf16.mxu0 %v693
        %743 = vmatpush2.bf16.msra.mxu0 %v692
        %744 = vmatprep.subr.bf16.mxu0 %v691
        %745 = vmatpush2.bf16.msra.mxu0 %v690
        %746 = vmatprep.subr.bf16.mxu0 %v689
        %747 = vmatpush2.bf16.msra.mxu0 %v688
        %748 = vmatprep.subr.bf16.mxu0 %v687
        %749 = vmatpush2.bf16.msra.mxu0 %v686
        %750 = vmatprep.subr.bf16.mxu0 %v685
        %751 = vmatpush2.bf16.msra.mxu0 %v684
        %752 = vmatprep.subr.bf16.mxu0 %v683
        %753 = vmatpush2.bf16.msra.mxu0 %v682
        %754 = vmatprep.subr.bf16.mxu0 %v681
        %755 = vmatpush2.bf16.msra.mxu0 %v680
        %756 = vmatprep.subr.bf16.mxu0 %v679
        %757 = vmatpush2.bf16.msra.mxu0 %v678
        %758 = vmatprep.mubr.bf16.mxu0 %v521
        %759 = vmatmul.mubr.bf16.gmra.mxu0 %v520
        %v760 = vpop.f32.mrf.mxu0
        %v761 = vadd.f32 %v559, %v760
        %v762 = vpop.f32.mrf.mxu0
        %v763 = vadd.f32 %v563, %v762
        %v764 = vpop.f32.mrf.mxu0
        %v765 = vpop.f32.mrf.mxu0
        %766 = vdwg.mxu0
        %v767 = vxor.u32 %v761, 2147483648
        %v768 = vxor.u32 %v763, 2147483648
        %v769 = vmul.f32 %v767, 1.442695
        %v770 = vpow.pop %v769
        %v771 = vmul.f32 %v768, 1.442695
        %v772 = vpow.pop %v771
        %v773 = vadd.f32 %v770, 1.0
        %v774 = vadd.f32 %v772, 1.0
        %v775 = vrcp.pop %v773
        %v776 = vmul.f32 1.0, %v775
        %v777 = vrcp.pop %v774
        %v778 = vmul.f32 1.0, %v777
        %v779 = vmul.f32 %v761, %v776
        %v780 = vmul.f32 %v763, %v778
        %v781 = vpack.c.bf16 %v779, %v779
        %v782 = vpack.c.bf16 %v780, %v780
        %v783 = vld [vmem:[%s263] sm:$0xf]
        %v784 = vld [vmem:[%s263 + $0x4] sm:$0xf]
        %v785 = vld [vmem:[%s263 + $0x8] sm:$0xf]
        %v786 = vld [vmem:[%s263 + $0xc] sm:$0xf]
        %v787 = vld [vmem:[%s263 + $0x10] sm:$0xf]
        %v788 = vld [vmem:[%s263 + $0x14] sm:$0xf]
        %v789 = vld [vmem:[%s263 + $0x18] sm:$0xf]
        %v790 = vld [vmem:[%s263 + $0x1c] sm:$0xf]
        %v791 = vld [vmem:[%s263 + $0x20] sm:$0xf]
        %v792 = vld [vmem:[%s263 + $0x24] sm:$0xf]
        %v793 = vld [vmem:[%s263 + $0x28] sm:$0xf]
        %v794 = vld [vmem:[%s263 + $0x2c] sm:$0xf]
        %v795 = vld [vmem:[%s263 + $0x30] sm:$0xf]
        %v796 = vld [vmem:[%s263 + $0x34] sm:$0xf]
        %v797 = vld [vmem:[%s263 + $0x38] sm:$0xf]
        %v798 = vld [vmem:[%s263 + $0x3c] sm:$0xf]
        %v799 = vld [vmem:[%s263 + $0x40] sm:$0xf]
        %v800 = vld [vmem:[%s263 + $0x44] sm:$0xf]
        %v801 = vld [vmem:[%s263 + $0x48] sm:$0xf]
        %v802 = vld [vmem:[%s263 + $0x4c] sm:$0xf]
        %v803 = vld [vmem:[%s263 + $0x50] sm:$0xf]
        %v804 = vld [vmem:[%s263 + $0x54] sm:$0xf]
        %v805 = vld [vmem:[%s263 + $0x58] sm:$0xf]
        %v806 = vld [vmem:[%s263 + $0x5c] sm:$0xf]
        %v807 = vld [vmem:[%s263 + $0x60] sm:$0xf]
        %v808 = vld [vmem:[%s263 + $0x64] sm:$0xf]
        %v809 = vld [vmem:[%s263 + $0x68] sm:$0xf]
        %v810 = vld [vmem:[%s263 + $0x6c] sm:$0xf]
        %v811 = vld [vmem:[%s263 + $0x70] sm:$0xf]
        %v812 = vld [vmem:[%s263 + $0x74] sm:$0xf]
        %v813 = vld [vmem:[%s263 + $0x78] sm:$0xf]
        %v814 = vld [vmem:[%s263 + $0x7c] sm:$0xf]
        %v815 = vld [vmem:[%s297] sm:$0x1]
        %v817 = vlaneseq
        %v818 = vshrl.u32 %v817, 7
        %v819 = vsub.s32 0, %v818
        %v820 = vrot.slane %v815, %v819
        %v854 = vunpack.c.l.b16 %v783
        %v855 = vunpack.c.l.b16 %v784
        %v856 = vunpack.c.l.b16 %v785
        %v857 = vunpack.c.l.b16 %v786
        %v858 = vunpack.c.l.b16 %v787
        %v859 = vunpack.c.l.b16 %v788
        %v860 = vunpack.c.l.b16 %v789
        %v861 = vunpack.c.l.b16 %v790
        %v862 = vunpack.c.l.b16 %v791
        %v863 = vunpack.c.l.b16 %v792
        %v864 = vunpack.c.l.b16 %v793
        %v865 = vunpack.c.l.b16 %v794
        %v866 = vunpack.c.l.b16 %v795
        %v867 = vunpack.c.l.b16 %v796
        %v868 = vunpack.c.l.b16 %v797
        %v869 = vunpack.c.l.b16 %v798
        %v870 = vunpack.c.l.b16 %v799
        %v871 = vunpack.c.l.b16 %v800
        %v872 = vunpack.c.l.b16 %v801
        %v873 = vunpack.c.l.b16 %v802
        %v874 = vunpack.c.l.b16 %v803
        %v875 = vunpack.c.l.b16 %v804
        %v876 = vunpack.c.l.b16 %v805
        %v877 = vunpack.c.l.b16 %v806
        %v878 = vunpack.c.l.b16 %v807
        %v879 = vunpack.c.l.b16 %v808
        %v880 = vunpack.c.l.b16 %v809
        %v881 = vunpack.c.l.b16 %v810
        %v882 = vunpack.c.l.b16 %v811
        %v883 = vunpack.c.l.b16 %v812
        %v884 = vunpack.c.l.b16 %v813
        %v885 = vunpack.c.l.b16 %v814
        %v886 = vpack.c.b16 %v855, %v854
        %v887 = vpack.c.b16 %v857, %v856
        %v888 = vpack.c.b16 %v859, %v858
        %v889 = vpack.c.b16 %v861, %v860
        %v890 = vpack.c.b16 %v863, %v862
        %v891 = vpack.c.b16 %v865, %v864
        %v892 = vpack.c.b16 %v867, %v866
        %v893 = vpack.c.b16 %v869, %v868
        %v894 = vpack.c.b16 %v871, %v870
        %v895 = vpack.c.b16 %v873, %v872
        %v896 = vpack.c.b16 %v875, %v874
        %v897 = vpack.c.b16 %v877, %v876
        %v898 = vpack.c.b16 %v879, %v878
        %v899 = vpack.c.b16 %v881, %v880
        %v900 = vpack.c.b16 %v883, %v882
        %v901 = vpack.c.b16 %v885, %v884
        %918 = vmatprep.subr.bf16.mxu0 0
        %919 = vmatpush1.bf16.msra.mxu0 %v893
        %920 = vmatprep.subr.bf16.mxu0 0
        %921 = vmatpush1.bf16.msra.mxu0 %v892
        %922 = vmatprep.subr.bf16.mxu0 0
        %923 = vmatpush1.bf16.msra.mxu0 %v891
        %924 = vmatprep.subr.bf16.mxu0 0
        %925 = vmatpush1.bf16.msra.mxu0 %v890
        %926 = vmatprep.subr.bf16.mxu0 0
        %927 = vmatpush1.bf16.msra.mxu0 %v889
        %928 = vmatprep.subr.bf16.mxu0 0
        %929 = vmatpush1.bf16.msra.mxu0 %v888
        %930 = vmatprep.subr.bf16.mxu0 0
        %931 = vmatpush1.bf16.msra.mxu0 %v887
        %932 = vmatprep.subr.bf16.mxu0 0
        %933 = vmatpush1.bf16.msra.mxu0 %v886
        %934 = vmatprep.subr.bf16.mxu0 0
        %935 = vmatpush2.bf16.msra.mxu0 %v901
        %936 = vmatprep.subr.bf16.mxu0 0
        %937 = vmatpush2.bf16.msra.mxu0 %v900
        %938 = vmatprep.subr.bf16.mxu0 0
        %939 = vmatpush2.bf16.msra.mxu0 %v899
        %940 = vmatprep.subr.bf16.mxu0 0
        %941 = vmatpush2.bf16.msra.mxu0 %v898
        %942 = vmatprep.subr.bf16.mxu0 0
        %943 = vmatpush2.bf16.msra.mxu0 %v897
        %944 = vmatprep.subr.bf16.mxu0 0
        %945 = vmatpush2.bf16.msra.mxu0 %v896
        %946 = vmatprep.subr.bf16.mxu0 0
        %947 = vmatpush2.bf16.msra.mxu0 %v895
        %948 = vmatprep.subr.bf16.mxu0 0
        %949 = vmatpush2.bf16.msra.mxu0 %v894
        %950 = vmatprep.mubr.bf16.mxu0 %v782
        %951 = vmatmul.mubr.bf16.gmra.mxu0 %v781
        %v952 = vpop.f32.mrf.mxu0
        %v953 = vadd.f32 %v820, %v952
        %v954 = vpop.f32.mrf.mxu0
        %v955 = vpop.f32.mrf.mxu0
        %v956 = vpop.f32.mrf.mxu0
        %957 = vdwg.mxu0
        %958 = vst [vmem:[%s294] sm:$0xff] %v953
        %s959 = sand.u32 %s168, 1
        %s960 = scalar_lea.sflag [#allocation4], %s959
        %s961 = sand.u32 %s168, 1
        %s962 = smul.addr %s961, 8
        %s963 = scalar_lea.vmem [#allocation7], %s962
        // Predicated region
        $region53: #{tpu_custom_call.1} parent=43 // pred_check
          %p964 = pneg %p178
        $region54: #{tpu_custom_call.1} parent=43 // pred_check_branch
          %966 = sbr.rel (%p964) target = $region56
        $region55: #{tpu_custom_call.1} parent=43 // pred_region
          %s968 = ssub.s32 128, 128
          %969 = vsyncadd %s960, %s968
          %s970 = smul.addr %s24, 128
          %s971 = scalar_lea.hbm %s6, %s970
          %s973 = sshll.u32 %s963, 4
          %s974 = int_to_ptr.vmem [resolvable:$true] %s973
          %976 = dma.vmem_to_hbm [thread:$0]  %s974, 128, %s971, %s960
        $region56: #{tpu_custom_call.1} parent=43 // pred_fallthru
          _
      $region44: #{tpu_custom_call.1} parent=5 // pred_fallthru
        _
      %p977 = scmp.le.s32.totalorder 2, %s19
      // Predicated region
      $region57: #{tpu_custom_call.1} parent=5 // pred_check
        %p978 = pneg %p977
      $region58: #{tpu_custom_call.1} parent=5 // pred_check_branch
        %980 = sbr.rel (%p978) target = $region60
      $region59: #{tpu_custom_call.1} parent=5 // pred_region
        %s981 = ssub.s32 %s19, 2
        // Predicated region
        $region61: #{tpu_custom_call.1} parent=59 // pred_check
          %p982 = pneg %p184
        $region62: #{tpu_custom_call.1} parent=59 // pred_check_branch
          %984 = sbr.rel (%p982) target = $region64
        $region63: #{tpu_custom_call.1} parent=59 // pred_region
          %s985 = sand.u32 %s169, 1
          %s986 = scalar_lea.sflag [#allocation4], %s985
          %s987 = sand.u32 %s169, 1
          %s988 = smul.addr %s987, 8
          %s989 = scalar_lea.vmem [#allocation7], %s988
          %990 = dma.done %s986, 128
        $region64: #{tpu_custom_call.1} parent=59 // pred_fallthru
          _
      $region60: #{tpu_custom_call.1} parent=5 // pred_fallthru
        _
    $region6: #{tpu_custom_call.1} parent=1 // loop_footer
      %s23 = sadd.s32 1, %s19
    $region7: #{tpu_custom_call.1} parent=1 // loop_footer_branch
      %18 = sbr.rel target = $region3
    $region8: #{tpu_custom_call.1} parent=1 // loop_exit
      _
    %991 = vsyncpa [#allocation3], 1
    %s992 = scalar_lea.sflag [#allocation3], 1
    %993 = vsyncpa %s992, 1
    %994 = vsyncpa [#allocation6], 1
    %s995 = scalar_lea.sflag [#allocation6], 1
    %996 = vsyncpa %s995, 1
    %997 = vsyncpa [#allocation4], 1
    %s998 = scalar_lea.sflag [#allocation4], 1
    %999 = vsyncpa %s998, 1

</llo_original>
